<compile_context>
chip_gen: v6e
topology: v6e:2x2x1
jax: 0.10.0
libtpu: 0.0.40
codegen_flags: <defaults>
</compile_context>

<pallas_src>
import functools

import jax
import jax.numpy as jnp
from jax.experimental import pallas as pl
from jax.experimental.pallas import tpu as pltpu

LOG2 = 0.6931471805599453

TM_MAX = 8192                 # max row tile (multiple of 8)
_TILE_BYTES = 2 << 20         # ~2 MiB target for the widest streamed tile
_PIPE_BYTES = 16 << 20        # budget for double-buffered streamed tiles
_STEPS_MIN = 8                # keep >= 8 grid steps when rows allow
_VMEM_LIMIT = 32 * 1024 * 1024  # safe on v5e/v6e (128 MiB) and v7x (64 MiB)


# --------------------------------------------------------------------------
# In-kernel helpers
# --------------------------------------------------------------------------
def _ssp(z):
    # shifted softplus: softplus(z) - log(2), numerically stable form
    return jnp.log(1.0 + jnp.exp(-jnp.abs(z))) + jnp.maximum(z, 0.0) - LOG2


def _sigmoid(z):
    return 1.0 / (1.0 + jnp.exp(-z))


def _dot16(a, w_bf16):
    # bf16 MXU operands (weights pre-cast once in init_params), f32 accumulation
    return jnp.dot(a.astype(jnp.bfloat16), w_bf16,
                   preferred_element_type=jnp.float32)


def _dot32(a, w_f32):
    # f32 matmul for the distance/edge path (force accuracy)
    return jnp.dot(a, w_f32, preferred_element_type=jnp.float32)


# --------------------------------------------------------------------------
# Pallas kernels (node side: bf16 MXU operands; edge side: f32)
# --------------------------------------------------------------------------
def _matmul_kernel(x_ref, w_ref, o_ref):
    o_ref[...] = _dot16(x_ref[...], w_ref[...])


def _dense_kernel(x_ref, w_ref, b_ref, o_ref):
    o_ref[...] = _dot16(x_ref[...], w_ref[...]) + b_ref[...]


def _mlp_fwd_kernel(x_ref, w1_ref, b1_ref, w2_ref, b2_ref, o_ref):
    z = _dot16(x_ref[...], w1_ref[...]) + b1_ref[...]
    o_ref[...] = _dot16(_ssp(z), w2_ref[...]) + b2_ref[...]


def _mlp_bwd_kernel(x_ref, g_ref, w1_ref, b1_ref, w2t_ref, w1t_ref, o_ref):
    # gx = ((g @ W2^T) * sigmoid(z)) @ W1^T  with z = x @ W1 + b1 recomputed
    z = _dot16(x_ref[...], w1_ref[...]) + b1_ref[...]
    dz = _dot16(g_ref[...], w2t_ref[...]) * _sigmoid(z)
    o_ref[...] = _dot16(dz, w1t_ref[...])


def _edge_msg_fwd_kernel(e_ref, ri_ref, rj_ref, off_ref, w1_ref, b1_ref,
                         w2_ref, b2_ref, rij_ref, rji_ref, *, coeff):
    # Gaussian smearing + edge-filter MLP + rij/rji message multiply fused.
    d = e_ref[...] - off_ref[...]                  # (TM,1)-(1,G) -> (TM,G)
    gauss = jnp.exp(coeff * d * d)
    z = _dot32(gauss, w1_ref[...]) + b1_ref[...]
    ef = _dot32(_ssp(z), w2_ref[...]) + b2_ref[...]
    rij_ref[...] = ri_ref[...] * ef
    rji_ref[...] = rj_ref[...] * ef


def _edge_msg_bwd_kernel(e_ref, ri_ref, rj_ref, gij_ref, gji_ref, off_ref,
                         w1_ref, b1_ref, w2_ref, b2_ref, w2t_ref, w1t_ref,
                         de_ref, dri_ref, drj_ref, *, coeff):
    d = e_ref[...] - off_ref[...]
    gauss = jnp.exp(coeff * d * d)
    z = _dot32(gauss, w1_ref[...]) + b1_ref[...]
    ef = _dot32(_ssp(z), w2_ref[...]) + b2_ref[...]
    gij = gij_ref[...]
    gji = gji_ref[...]
    dri_ref[...] = gij * ef
    drj_ref[...] = gji * ef
    # backprop through the edge-filter MLP and the Gaussian smearing
    gef = gij * ri_ref[...] + gji * rj_ref[...]
    dz = _dot32(gef, w2t_ref[...]) * _sigmoid(z)
    dgauss = _dot32(dz, w1t_ref[...])
    de_ref[...] = jnp.sum(dgauss * ((2.0 * coeff) * d * gauss),
                          axis=-1, keepdims=True)


# --------------------------------------------------------------------------
# Row-tiled pallas_call runner
# --------------------------------------------------------------------------
def _round_up(n, m):
    return ((n + m - 1) // m) * m


def _pick_tm(n, widths):
    """Byte-sized row tile: ~2 MiB widest tile, <=16 MiB pipeline buffers,
    >= _STEPS_MIN grid steps when possible, multiple of 8."""
    row_bytes = 4 * sum(widths)                       # streamed tensors are f32
    tm = _TILE_BYTES // (4 * max(widths))
    tm = min(tm, _PIPE_BYTES // (2 * row_bytes))      # 2x for double buffering
    tm = min(tm, TM_MAX)
    tm = min(tm, pl.cdiv(n, _STEPS_MIN))
    return max(8, _round_up(tm, 8))


def _row_call(kernel, streamed, resident, douts, *, parallel=True):
    """Run `kernel` tiled over rows with a ragged last block (no padding).

    `streamed`: list of (n, f) f32 arrays sharing the row count n.
    `resident`: list of 2-D arrays kept whole in VMEM (constant index_map).
    `douts`: output feature width (int) or tuple of widths for multi-output.
    """
    multi = isinstance(douts, (tuple, list))
    dout_list = list(douts) if multi else [douts]
    n = streamed[0].shape[0]
    widths = [a.shape[1] for a in streamed] + dout_list
    tm = _pick_tm(n, widths)
    grid = (pl.cdiv(n, tm),)

    in_specs = [pl.BlockSpec((tm, a.shape[1]), lambda i: (i, 0))
                for a in streamed]
    in_specs += [pl.BlockSpec(tuple(w.shape), lambda i: (0, 0))
                 for w in resident]
    out_specs = tuple(pl.BlockSpec((tm, d), lambda i: (i, 0))
                      for d in dout_list)
    out_shapes = tuple(jax.ShapeDtypeStruct((n, d), jnp.float32)
                       for d in dout_list)

    if parallel:
        cparams = pltpu.CompilerParams(dimension_semantics=("parallel",),
                                       vmem_limit_bytes=_VMEM_LIMIT)
    else:
        # Backward kernels are vmapped for the batched multi-key force pass;
        # leave dimension_semantics unset so the batch grid axis added by vmap
        # cannot conflict with a fixed-length semantics tuple.
        cparams = pltpu.CompilerParams(vmem_limit_bytes=_VMEM_LIMIT)

    out = pl.pallas_call(
        kernel,
        out_shape=out_shapes if multi else out_shapes[0],
        grid_spec=pltpu.PrefetchScalarGridSpec(
            num_scalar_prefetch=0,
            grid=grid,
            in_specs=in_specs,
            out_specs=out_specs if multi else out_specs[0],
        ),
        compiler_params=cparams,
    )(*streamed, *resident)
    return out


# --------------------------------------------------------------------------
# custom_vjp wrappers (only activation/edge cotangents are needed: the "_grad"
# outputs are d(energy)/d(xyz); weight/bias cotangents are returned as zeros)
# --------------------------------------------------------------------------
def _dense_impl(x, w, b):
    return _row_call(_dense_kernel, [x], [w, b.reshape(1, -1)], w.shape[1])


@jax.custom_vjp
def dense(x, w, b, wT):
    return _dense_impl(x, w, b)


def _dense_fwd(x, w, b, wT):
    return _dense_impl(x, w, b), (w, b, wT)


def _dense_bwd(res, g):
    w, b, wT = res
    gx = _row_call(_matmul_kernel, [g], [wT], wT.shape[1], parallel=False)
    return gx, jnp.zeros_like(w), jnp.zeros_like(b), jnp.zeros_like(wT)


dense.defvjp(_dense_fwd, _dense_bwd)


def _mlp_impl(x, w1, b1, w2, b2):
    return _row_call(_mlp_fwd_kernel, [x],
                     [w1, b1.reshape(1, -1), w2, b2.reshape(1, -1)],
                     w2.shape[1])


@jax.custom_vjp
def mlp_ssp(x, w1, b1, w2, b2, w1T, w2T):
    return _mlp_impl(x, w1, b1, w2, b2)


def _mlp_ssp_fwd(x, w1, b1, w2, b2, w1T, w2T):
    return _mlp_impl(x, w1, b1, w2, b2), (x, w1, b1, w2, b2, w1T, w2T)


def _mlp_ssp_bwd(res, g):
    x, w1, b1, w2, b2, w1T, w2T = res
    gx = _row_call(_mlp_bwd_kernel, [x, g],
                   [w1, b1.reshape(1, -1), w2T, w1T], w1T.shape[1],
                   parallel=False)
    return (gx, jnp.zeros_like(w1), jnp.zeros_like(b1), jnp.zeros_like(w2),
            jnp.zeros_like(b2), jnp.zeros_like(w1T), jnp.zeros_like(w2T))


mlp_ssp.defvjp(_mlp_ssp_fwd, _mlp_ssp_bwd)


def _edge_message_impl(coeff, e, ri, rj, offsets, w1, b1, w2, b2):
    Fl = w2.shape[1]
    kern = functools.partial(_edge_msg_fwd_kernel, coeff=coeff)
    rij, rji = _row_call(kern, [e, ri, rj],
                         [offsets, w1, b1.reshape(1, -1), w2, b2.reshape(1, -1)],
                         (Fl, Fl))
    return rij, rji


@functools.partial(jax.custom_vjp, nondiff_argnums=(0,))
def edge_message(coeff, e, ri, rj, offsets, w1, b1, w2, b2, w1T, w2T):
    return _edge_message_impl(coeff, e, ri, rj, offsets, w1, b1, w2, b2)


def _edge_message_fwd(coeff, e, ri, rj, offsets, w1, b1, w2, b2, w1T, w2T):
    out = _edge_message_impl(coeff, e, ri, rj, offsets, w1, b1, w2, b2)
    return out, (e, ri, rj, offsets, w1, b1, w2, b2, w1T, w2T)


def _edge_message_bwd(coeff, res, g):
    e, ri, rj, offsets, w1, b1, w2, b2, w1T, w2T = res
    gij, gji = g
    Fl = w2.shape[1]
    kern = functools.partial(_edge_msg_bwd_kernel, coeff=coeff)
    de, dri, drj = _row_call(
        kern, [e, ri, rj, gij, gji],
        [offsets, w1, b1.reshape(1, -1), w2, b2.reshape(1, -1), w2T, w1T],
        (1, Fl, Fl), parallel=False)
    z = jnp.zeros_like
    return (de, dri, drj, z(offsets), z(w1), z(b1), z(w2), z(b2),
            z(w1T), z(w2T))


edge_message.defvjp(_edge_message_fwd, _edge_message_bwd)


# --------------------------------------------------------------------------
# Deterministic parameter initialization (shapes from SchNet.__init__)
# --------------------------------------------------------------------------
def _linear_init(key, din, dout):
    kw, kb = jax.random.split(key)
    scale = 1.0 / float(din) ** 0.5
    w = jax.random.uniform(kw, (din, dout), jnp.float32, -scale, scale)
    b = jax.random.uniform(kb, (dout,), jnp.float32, -scale, scale)
    return w, b


def init_params(key, cfg):
    kit = iter(jax.random.split(key, 64))
    F = cfg["n_atom_basis"]
    Fl = cfg["n_filters"]
    G = cfg["n_gaussians"]
    bf = lambda w: w.astype(jnp.bfloat16)     # pre-cast node-side weights once

    embed = jax.random.normal(next(kit), (100, F), jnp.float32) * 0.1
    embed = embed.at[0].set(0.0)                       # padding_idx=0
    offsets = jnp.linspace(0.0, cfg["cutoff"], G).astype(jnp.float32)
    width = cfg["cutoff"] / (G - 1)
    coeff = -0.5 / width ** 2                          # python float (static)

    convs = []
    for _ in range(cfg["n_convolutions"]):
        We1, be1 = _linear_init(next(kit), G, G)       # edge filter Dense 1
        We2, be2 = _linear_init(next(kit), G, Fl)      # edge filter Dense 2
        Wn, bn = _linear_init(next(kit), F, Fl)        # node filter Dense
        Wu1, bu1 = _linear_init(next(kit), Fl, F)      # update Dense 1
        Wu2, bu2 = _linear_init(next(kit), F, F)       # update Dense 2
        convs.append(dict(
            # edge path kept f32 (forces are distance-sensitive)
            We1=We1, be1=be1, We2=We2, be2=be2,
            We1T=We1.T, We2T=We2.T,
            # node-side matmul operands pre-cast to bf16 (biases stay f32)
            Wn=bf(Wn), bn=bn, WnT=bf(Wn.T),
            Wu1=bf(Wu1), bu1=bu1, Wu2=bf(Wu2), bu2=bu2,
            Wu1T=bf(Wu1.T), Wu2T=bf(Wu2.T),
            offsets=offsets.reshape(1, G)))

    # NodeMultiTaskReadOut heads fused: one (F, H*K) first layer and a
    # block-diagonal (H*K, K) second layer -> one lane-denser (N, K) output.
    H = cfg["readout_hidden"]
    keys = cfg["output_keys"]
    K = len(keys)
    W1s, b1s, b2s = [], [], []
    W2bd = jnp.zeros((H * K, K), jnp.float32)
    for k in range(K):
        W1, b1 = _linear_init(next(kit), F, H)
        W2, b2 = _linear_init(next(kit), H, 1)
        W1s.append(W1)
        b1s.append(b1)
        b2s.append(b2)
        W2bd = W2bd.at[k * H:(k + 1) * H, k].set(W2[:, 0])
    W1a = jnp.concatenate(W1s, axis=1)
    b1a = jnp.concatenate(b1s, axis=0)
    b2a = jnp.concatenate(b2s, axis=0)
    readout = dict(W1=bf(W1a), b1=b1a, W2=bf(W2bd), b2=b2a,
                   W1T=bf(W1a.T), W2T=bf(W2bd.T))
    return dict(embed=embed, convs=convs, coeff=coeff, readout=readout)


# --------------------------------------------------------------------------
# SchNet forward (convolve + atomwise readout + per-molecule sum)
# --------------------------------------------------------------------------
def schnet_energies(params, z, nbr_list, mol_idx, n_atoms, n_mols, xyz):
    # edge distances e = ||xyz_i - xyz_j||  (offsets = 0)
    diff = xyz[nbr_list[:, 0]] - xyz[nbr_list[:, 1]]
    e = jnp.sqrt(jnp.sum(diff ** 2, axis=1))[:, None]           # (n_edges, 1)
    r = params["embed"][z]                                      # (n_atoms, F)
    coeff = params["coeff"]

    for cp in params["convs"]:
        # message_node_filter: Dense                                  (Pallas)
        r_filt = dense(r, cp["Wn"], cp["bn"], cp["WnT"])
        # TODO(synk): gather + segment_sum still in XLA; fuse via scalar-
        #             prefetch nbr_list + in-kernel CSR accumulate.
        ri = r_filt[nbr_list[:, 0]]
        rj = r_filt[nbr_list[:, 1]]
        # GaussianSmear -> Dense -> ssp -> Dense -> rij/rji multiply (fused)
        rij, rji = edge_message(coeff, e, ri, rj, cp["offsets"],
                                cp["We1"], cp["be1"], cp["We2"], cp["be2"],
                                cp["We1T"], cp["We2T"])
        # symmetric aggregation (XLA scatter-add glue)
        agg = (jax.ops.segment_sum(rij, nbr_list[:, 1], num_segments=n_atoms)
               + jax.ops.segment_sum(rji, nbr_list[:, 0], num_segments=n_atoms))
        # update_function: Dense -> shifted_softplus -> Dense         (Pallas)
        r = r + mlp_ssp(agg, cp["Wu1"], cp["bu1"], cp["Wu2"], cp["bu2"],
                        cp["Wu1T"], cp["Wu2T"])

    # all readout heads fused in ONE Pallas kernel -> (n_atoms, n_keys)
    rp = params["readout"]
    atom_e = mlp_ssp(r, rp["W1"], rp["b1"], rp["W2"], rp["b2"],
                     rp["W1T"], rp["W2T"])
    # batch_and_sum: per-molecule energies for all keys at once (n_mols, K)
    return jax.ops.segment_sum(atom_e, mol_idx, num_segments=n_mols)


def schnet_forward(params, batch, cfg):
    """SchNet.forward: energies per output key plus d(energy)/d(xyz) grads."""
    nxyz = batch["nxyz"]
    xyz = nxyz[:, 1:4]
    z = nxyz[:, 0].astype(jnp.int32)
    nbr = batch["nbr_list"]
    mol_idx = batch["mol_idx"]
    n_atoms = nxyz.shape[0]
    n_mols = cfg["n_mols"]
    keys = cfg["output_keys"]
    K = len(keys)

    efn = lambda xyz_: schnet_energies(params, z, nbr, mol_idx,
                                       n_atoms, n_mols, xyz_)
    mol_e, vjp_fn = jax.vjp(efn, xyz)                    # (n_mols, K)

    # one batched backward for all K output keys (seed = one-hot per key)
    seeds = jnp.broadcast_to(jnp.eye(K, dtype=mol_e.dtype)[:, None, :],
                             (K, n_mols, K))
    try:
        dxyz = jax.vmap(vjp_fn)(seeds)[0]                # (K, n_atoms, 3)
    except Exception:
        # fallback: per-key backward (kept for environments where vmapping a
        # pallas_call backward is not supported)
        dxyz = jnp.stack([vjp_fn(seeds[k])[0] for k in range(K)])

    results = {}
    for k, key in enumerate(keys):
        results[key] = mol_e[:, k]
        # "_grad" = d(energy)/d(xyz), as in nff's compute_grad / batch_and_sum
        results[key + "_grad"] = dxyz[k]
    return results


# --------------------------------------------------------------------------
if __name__ == "__main__":
    cfg = dict(n_atom_basis=32, n_filters=32, n_gaussians=16,
               n_convolutions=2, cutoff=5.0, readout_hidden=16,
               output_keys=["energy_0", "energy_1"], n_mols=2)

    key = jax.random.PRNGKey(0)
    kp, kz, kx = jax.random.split(key, 3)
    params = init_params(kp, cfg)

    # batch: 2 molecules with 5 and 7 atoms
    num_atoms = [5, 7]
    n_atoms = sum(num_atoms)
    z = jax.random.randint(kz, (n_atoms,), 1, 10)
    xyz = jax.random.normal(kx, (n_atoms, 3), jnp.float32) * 1.5
    nxyz = jnp.concatenate([z.astype(jnp.float32)[:, None], xyz], axis=1)
    mol_idx = jnp.concatenate(
        [jnp.full((n,), i, jnp.int32) for i, n in enumerate(num_atoms)])

    # undirected neighbor list (i < j within each molecule), like nff nbr_list
    pairs = []
    start = 0
    for n in num_atoms:
        for i in range(start, start + n):
            for j in range(i + 1, start + n):
                pairs.append((i, j))
        start += n
    nbr_list = jnp.array(pairs, dtype=jnp.int32)

    batch = dict(nxyz=nxyz, nbr_list=nbr_list, mol_idx=mol_idx,
                 num_atoms=jnp.array(num_atoms, jnp.int32))

    results = schnet_forward(params, batch, cfg)
    results = jax.tree_util.tree_map(jax.block_until_ready, results)

    assert results["energy_0"].shape == (cfg["n_mols"],)
    assert results["energy_1"].shape == (cfg["n_mols"],)
    assert results["energy_0_grad"].shape == (n_atoms, 3)
    assert results["energy_1_grad"].shape == (n_atoms, 3)
    for v in jax.tree_util.tree_leaves(results):
        assert bool(jnp.all(jnp.isfinite(v)))
    print("KERNEL_OK")
</pallas_src>

<mosaic_0001>
module attributes {stable_mosaic.version = 11 : i64} {
  func.func @_dense_kernel(%arg0: i32, %arg1: memref<8x32xf32, #tpu.memory_space<vmem>>, %arg2: memref<32x32xbf16, #tpu.memory_space<vmem>>, %arg3: memref<1x32xf32, #tpu.memory_space<vmem>>, %arg4: memref<8x32xf32, #tpu.memory_space<vmem>>) attributes {dimension_semantics = [#tpu.dimension_semantics<parallel>], iteration_bounds = array<i64: 2>, scalar_prefetch = 0 : i64, scratch_operands = 0 : i64, tpu.core_type = #tpu.core_type<tc>, window_params = [{transform_indices = @transform_0, window_bounds = array<i64: 8, 32>}, {pipeline_mode = #tpu.pipeline_mode<synchronous>, transform_indices = @transform_1, window_bounds = array<i64: 32, 32>}, {pipeline_mode = #tpu.pipeline_mode<synchronous>, transform_indices = @transform_2, window_bounds = array<i64: 1, 32>}, {transform_indices = @transform_3, window_bounds = array<i64: 8, 32>}]} {
    %c0 = arith.constant 0 : index
    %c0_0 = arith.constant 0 : index
    %0 = vector.load %arg1[%c0, %c0_0] : memref<8x32xf32, #tpu.memory_space<vmem>>, vector<8x32xf32>
    %c0_1 = arith.constant 0 : index
    %c0_2 = arith.constant 0 : index
    %1 = vector.load %arg2[%c0_1, %c0_2] : memref<32x32xbf16, #tpu.memory_space<vmem>>, vector<32x32xbf16>
    %2 = arith.truncf %0 : vector<8x32xf32> to vector<8x32xbf16>
    %cst = arith.constant dense<0.000000e+00> : vector<8x32xf32>
    %3 = tpu.matmul %2, %1, %cst {dimension_numbers = #tpu.dot_dimension_numbers<[1], [0], [0], [1], [0, 0, 1, 1], [], []>} : vector<8x32xbf16>, vector<32x32xbf16>, vector<8x32xf32> -> vector<8x32xf32>
    %c0_3 = arith.constant 0 : index
    %c0_4 = arith.constant 0 : index
    %4 = vector.load %arg3[%c0_3, %c0_4] : memref<1x32xf32, #tpu.memory_space<vmem>>, vector<1x32xf32>
    %5 = vector.broadcast %4 : vector<1x32xf32> to vector<8x32xf32>
    %6 = arith.addf %3, %5 : vector<8x32xf32>
    %c0_5 = arith.constant 0 : index
    %c0_6 = arith.constant 0 : index
    %7 = vector.load %arg4[%c0_5, %c0_6] : memref<8x32xf32, #tpu.memory_space<vmem>>, vector<8x32xf32>
    tpu.vector_store %arg4[%c0_5, %c0_6], %6 {strides = array<i32>} : memref<8x32xf32, #tpu.memory_space<vmem>>, vector<8x32xf32>,
    return
  }
  func.func @transform_0(%arg0: i32) -> (i32, i32) {
    %c0_i32 = arith.constant 0 : i32
    %c0_i32_0 = arith.constant 0 : i32
    return %arg0, %c0_i32 : i32, i32
  }
  func.func @transform_1(%arg0: i32) -> (i32, i32) {
    %c0_i32 = arith.constant 0 : i32
    %c0_i32_0 = arith.constant 0 : i32
    %c0_i32_1 = arith.constant 0 : i32
    return %c0_i32, %c0_i32_0 : i32, i32
  }
  func.func @transform_2(%arg0: i32) -> (i32, i32) {
    %c0_i32 = arith.constant 0 : i32
    %c0_i32_0 = arith.constant 0 : i32
    %c0_i32_1 = arith.constant 0 : i32
    return %c0_i32, %c0_i32_0 : i32, i32
  }
  func.func @transform_3(%arg0: i32) -> (i32, i32) {
    %c0_i32 = arith.constant 0 : i32
    %c0_i32_0 = arith.constant 0 : i32
    return %arg0, %c0_i32 : i32, i32
  }
}

</mosaic_0001>

<llo_original>
// kernel: tpu_custom_call.1
$region0: #{tpu_custom_call.1}
  #allocation0 [shape = 'u32[]', space=smem, size = 0x4, offset = 0x4, fixed_abs, tag = 'smem constant byte address 0x4 - core index']
  #allocation1 [shape = 'u32[144,128]{1,0:T(1,128)}', space=vmem, size = 0x12000, scoped, tag = 'internal scratch']
  %s0 = inlined_call_operand.hbm [shape: f32[12,32], index: 0, kind: input, shape index: {}]
  %s1 = inlined_call_operand.hbm [shape: bf16[32,32], index: 1, kind: input, shape index: {}]
  %s2 = inlined_call_operand.vmem [shape: f32[1,32], index: 2, kind: input, shape index: {}]
  %s3 = inlined_call_operand.hbm [shape: f32[12,32], index: 3, kind: output, shape index: {}]
  %s4 = sld [smem:[#allocation0]]
  $region53: #{tpu_custom_call.1} parent=0
    _
  %s6 = ssub.s32 1, %s4
  %s7 = scalar_select 0, %s6, %s4
  $region1: #{tpu_custom_call.1} parent=0
    #allocation2 [shape = 'u8[8192]{0}', space=vmem, size = 0x2000, scoped, tag = 'input window, operand 0']
    #allocation3 [shape = 's32[2]{0}', space=sflag, size = 0x8, scoped, tag = 'scoped memory for tpu_custom_call.1']
    #allocation4 [shape = 's32[2]{0}', space=sflag, size = 0x8, scoped, tag = 'scoped memory for tpu_custom_call.1']
    #allocation5 [shape = 'u8[8192]{0}', space=vmem, size = 0x2000, scoped, tag = 'input window, operand 1, single buffered']
    #allocation6 [shape = 's32[1]{0}', space=sflag, size = 0x4, scoped, tag = 'scoped memory for tpu_custom_call.1']
    #allocation7 [shape = 'u8[8192]{0}', space=vmem, size = 0x2000, scoped, tag = 'output window, operand 0']
    %8 = vsyncpa [#allocation3], 0
    %s9 = scalar_lea.sflag [#allocation3], 1
    %10 = vsyncpa %s9, 0
    %11 = vsyncpa [#allocation6], 0
    %12 = vsyncpa [#allocation4], 0
    %s13 = scalar_lea.sflag [#allocation4], 1
    %14 = vsyncpa %s13, 0
    loop: start=0, step=1, limit=4
    $region2: #{tpu_custom_call.1} parent=1 // loop_pre_header
      _
    $region3: #{tpu_custom_call.1} parent=1 // loop_header
      %s16 = sphi 0, %s20
      %p17 = scmp.ge.s32.totalorder %s16, 4
      %s26 = sphi 0, %s28
      %s29 = sphi 0, %s26
      %s30 = sphi 0, %s29
      %s46 = sphi 0, %s30
      %s50 = sphi 0, %s50
      %s52 = sphi 0, %s50
      %s53 = sphi 0, %s52
      %s67 = sphi 0, %s53
      %s71 = sphi 0, %s71
      %s73 = sphi 0, %s71
      %s74 = sphi 0, %s73
      %s88 = sphi 0, %s74
      %s94 = sphi 0, %s96
      %s97 = sphi 0, %s94
      %s98 = sphi 0, %s97
      %s114 = sphi 0, %s98
    $region4: #{tpu_custom_call.1} parent=1 // loop_header_branch
      %19 = sbr.rel (%p17) target = $region8
    $region5: #{tpu_custom_call.1} parent=1 // loop_body
      %s21 = ssub.s32 %s16, 1
      %s22 = ssub.s32 %s16, 2
      %s23 = sadd.s32 %s16, 1
      %s24 = ssub.s32 %s16, %s23
      %p25 = scmp.eq.s32.totalorder %s24, 0
      %s27 = sadd.s32 %s26, 1
      %s28 = scalar_select %p25, %s26, %s27
      %p31 = pneg %p25
      %p32 = scmp.eq.s32.totalorder %s16, 1
      %p33 = por %p31, %p32
      %p34 = scmp.ne.s32.totalorder %s26, %s29
      %p35 = scmp.eq.s32.totalorder %s16, 0
      %p36 = por %p34, %p35
      %p37 = scmp.ne.s32.totalorder %s26, %s29
      %p38 = scmp.eq.s32.totalorder %s21, 1
      %p39 = por %p37, %p38
      %p40 = scmp.ne.s32.totalorder %s29, %s30
      %p41 = scmp.eq.s32.totalorder %s21, 0
      %p42 = por %p40, %p41
      %p43 = scmp.ne.s32.totalorder %s29, %s30
      %p44 = scmp.eq.s32.totalorder %s22, 1
      %p45 = por %p43, %p44
      %p47 = scmp.ne.s32.totalorder %s30, %s46
      %p48 = scmp.eq.s32.totalorder %s22, 0
      %p49 = por %p47, %p48
      %s51 = sadd.s32 %s50, 1
      %p54 = scmp.eq.s32.totalorder %s16, 1
      %p55 = scmp.ne.s32.totalorder %s50, %s52
      %p56 = scmp.eq.s32.totalorder %s16, 0
      %p57 = por %p55, %p56
      %p58 = scmp.ne.s32.totalorder %s50, %s52
      %p59 = scmp.eq.s32.totalorder %s21, 1
      %p60 = por %p58, %p59
      %p61 = scmp.ne.s32.totalorder %s52, %s53
      %p62 = scmp.eq.s32.totalorder %s21, 0
      %p63 = por %p61, %p62
      %p64 = scmp.ne.s32.totalorder %s52, %s53
      %p65 = scmp.eq.s32.totalorder %s22, 1
      %p66 = por %p64, %p65
      %p68 = scmp.ne.s32.totalorder %s53, %s67
      %p69 = scmp.eq.s32.totalorder %s22, 0
      %p70 = por %p68, %p69
      %s72 = sadd.s32 %s71, 1
      %p75 = scmp.eq.s32.totalorder %s16, 1
      %p76 = scmp.ne.s32.totalorder %s71, %s73
      %p77 = scmp.eq.s32.totalorder %s16, 0
      %p78 = por %p76, %p77
      %p79 = scmp.ne.s32.totalorder %s71, %s73
      %p80 = scmp.eq.s32.totalorder %s21, 1
      %p81 = por %p79, %p80
      %p82 = scmp.ne.s32.totalorder %s73, %s74
      %p83 = scmp.eq.s32.totalorder %s21, 0
      %p84 = por %p82, %p83
      %p85 = scmp.ne.s32.totalorder %s73, %s74
      %p86 = scmp.eq.s32.totalorder %s22, 1
      %p87 = por %p85, %p86
      %p89 = scmp.ne.s32.totalorder %s74, %s88
      %p90 = scmp.eq.s32.totalorder %s22, 0
      %p91 = por %p89, %p90
      %s92 = ssub.s32 %s16, %s23
      %p93 = scmp.eq.s32.totalorder %s92, 0
      %s95 = sadd.s32 %s94, 1
      %s96 = scalar_select %p93, %s94, %s95
      %p99 = pneg %p93
      %p100 = scmp.eq.s32.totalorder %s16, 1
      %p101 = por %p99, %p100
      %p102 = scmp.ne.s32.totalorder %s94, %s97
      %p103 = scmp.eq.s32.totalorder %s16, 0
      %p104 = por %p102, %p103
      %p105 = scmp.ne.s32.totalorder %s94, %s97
      %p106 = scmp.eq.s32.totalorder %s21, 1
      %p107 = por %p105, %p106
      %p108 = scmp.ne.s32.totalorder %s97, %s98
      %p109 = scmp.eq.s32.totalorder %s21, 0
      %p110 = por %p108, %p109
      %p111 = scmp.ne.s32.totalorder %s97, %s98
      %p112 = scmp.eq.s32.totalorder %s22, 1
      %p113 = por %p111, %p112
      %p115 = scmp.ne.s32.totalorder %s98, %s114
      %p116 = scmp.eq.s32.totalorder %s22, 0
      %p117 = por %p115, %p116
      %p118 = scmp.le.s32.totalorder 1, %s16
      %p119 = scmp.lt.s32.totalorder %s16, 3
      %p120 = pnand %p118, %p119
      %p121 = pneg %p120
      // Predicated region
      $region9: #{tpu_custom_call.1} parent=5 // pred_check
        _
      $region10: #{tpu_custom_call.1} parent=5 // pred_check_branch
        %123 = sbr.rel (%p120) target = $region12
      $region11: #{tpu_custom_call.1} parent=5 // pred_region
        %s124 = ssub.s32 %s16, 1
        // Predicated region
        $region13: #{tpu_custom_call.1} parent=11 // pred_check
          %p125 = pneg %p63
        $region14: #{tpu_custom_call.1} parent=11 // pred_check_branch
          %127 = sbr.rel (%p125) target = $region16
        $region15: #{tpu_custom_call.1} parent=11 // pred_region
          %s129 = ssub.s32 256, 256
          %130 = vsyncadd [#allocation6], %s129
          %s131 = sshll.u32 [#allocation5], 4
          %s132 = int_to_ptr.vmem [resolvable:$true] %s131
          %137 = dma.hbm_to_vmem [thread:$0]  %s1, 256, %s132, [#allocation6], 64, 64, 4
        $region16: #{tpu_custom_call.1} parent=11 // pred_fallthru
          _
        // Predicated region
        $region17: #{tpu_custom_call.1} parent=11 // pred_check
          %p138 = pneg %p84
        $region18: #{tpu_custom_call.1} parent=11 // pred_check_branch
          %140 = sbr.rel (%p138) target = $region20
        $region19: #{tpu_custom_call.1} parent=11 // pred_region
          _
        $region20: #{tpu_custom_call.1} parent=11 // pred_fallthru
          _
      $region12: #{tpu_custom_call.1} parent=5 // pred_fallthru
        _
      %p141 = scmp.lt.s32.totalorder %s16, 2
      // Predicated region
      $region21: #{tpu_custom_call.1} parent=5 // pred_check
        %p142 = pneg %p141
      $region22: #{tpu_custom_call.1} parent=5 // pred_check_branch
        %144 = sbr.rel (%p142) target = $region24
      $region23: #{tpu_custom_call.1} parent=5 // pred_region
        // Predicated region
        $region25: #{tpu_custom_call.1} parent=23 // pred_check
          %p145 = pneg %p36
        $region26: #{tpu_custom_call.1} parent=23 // pred_check_branch
          %147 = sbr.rel (%p145) target = $region28
        $region27: #{tpu_custom_call.1} parent=23 // pred_region
          %s148 = sand.u32 %s26, 1
          %s149 = scalar_lea.sflag [#allocation3], %s148
          %s150 = sand.u32 %s26, 1
          %s151 = smul.addr %s150, 8
          %s152 = scalar_lea.vmem [#allocation2], %s151
          %s154 = ssub.s32 128, 128
          %155 = vsyncadd %s149, %s154
          %s156 = smul.addr %s16, 128
          %s157 = scalar_lea.hbm %s0, %s156
          %s159 = sshll.u32 %s152, 4
          %s160 = int_to_ptr.vmem [resolvable:$true] %s159
          %162 = dma.hbm_to_vmem [thread:$0]  %s157, 128, %s160, %s149
        $region28: #{tpu_custom_call.1} parent=23 // pred_fallthru
          _
      $region24: #{tpu_custom_call.1} parent=5 // pred_fallthru
        _
      %p163 = scmp.le.s32.totalorder 1, %s16
      %p164 = scmp.lt.s32.totalorder %s16, 3
      %p165 = pnand %p163, %p164
      %p166 = pneg %p165
      // Predicated region
      $region29: #{tpu_custom_call.1} parent=5 // pred_check
        _
      $region30: #{tpu_custom_call.1} parent=5 // pred_check_branch
        %168 = sbr.rel (%p165) target = $region32
      $region31: #{tpu_custom_call.1} parent=5 // pred_region
        %s169 = ssub.s32 %s16, 1
        %s170 = sand.u32 %s29, 1
        %s171 = scalar_lea.sflag [#allocation3], %s170
        %s172 = sand.u32 %s29, 1
        %s173 = smul.addr %s172, 8
        %s174 = scalar_lea.vmem [#allocation2], %s173
        // Predicated region
        $region33: #{tpu_custom_call.1} parent=31 // pred_check
          %p175 = pneg %p42
        $region34: #{tpu_custom_call.1} parent=31 // pred_check_branch
          %177 = sbr.rel (%p175) target = $region36
        $region35: #{tpu_custom_call.1} parent=31 // pred_region
          %178 = dma.done %s171, 128
        $region36: #{tpu_custom_call.1} parent=31 // pred_fallthru
          _
        // Predicated region
        $region37: #{tpu_custom_call.1} parent=31 // pred_check
          %p179 = pneg %p63
        $region38: #{tpu_custom_call.1} parent=31 // pred_check_branch
          %181 = sbr.rel (%p179) target = $region40
        $region39: #{tpu_custom_call.1} parent=31 // pred_region
          %182 = dma.done [#allocation6], 256
        $region40: #{tpu_custom_call.1} parent=31 // pred_fallthru
          _
        %s183 = sand.u32 %s29, 1
        %s184 = scalar_lea.sflag [#allocation3], %s183
        %s185 = sand.u32 %s29, 1
        %s186 = smul.addr %s185, 8
        %s187 = scalar_lea.vmem [#allocation2], %s186
        %p188 = pneg %p42
        %p189 = pneg %p39
        %p190 = pneg %p63
        %p191 = pneg %p60
        %p192 = pneg %p84
        %p193 = pneg %p81
        %p194 = pneg %p110
        %p195 = pneg %p107
        %s196 = sand.u32 %s97, 1
        %s197 = scalar_lea.sflag [#allocation4], %s196
        %s198 = sand.u32 %s97, 1
        %s199 = smul.addr %s198, 8
        %s200 = scalar_lea.vmem [#allocation7], %s199
        %v202 = vld [vmem:[%s174] sm:$0xff]
        %v203 = vld [vmem:[#allocation5] sm:$0xf]
        %v204 = vld [vmem:[#allocation5 + $0x4] sm:$0xf]
        %v205 = vld [vmem:[#allocation5 + $0x8] sm:$0xf]
        %v206 = vld [vmem:[#allocation5 + $0xc] sm:$0xf]
        %v207 = vpack.c.bf16 %v202, %v202
        %v208 = vld [vmem:[%s2] sm:$0x1]
        %v210 = vlaneseq
        %v211 = vshrl.u32 %v210, 7
        %v212 = vsub.s32 0, %v211
        %v213 = vrot.slane %v208, %v212
        %v219 = vunpack.c.l.b16 %v203
        %v220 = vunpack.c.l.b16 %v204
        %v221 = vunpack.c.l.b16 %v205
        %v222 = vunpack.c.l.b16 %v206
        %v223 = vpack.c.b16 %v220, %v219
        %v224 = vpack.c.b16 %v222, %v221
        %vm227 = vcmask 261120
        %v229 = vsel %vm227, %v207, 0
        %231 = vmatprep.subr.bf16.mxu0 0
        %232 = vmatpush1.bf16.msra.mxu0 0
        %233 = vmatprep.subr.bf16.mxu0 0
        %234 = vmatpush1.bf16.msra.mxu0 0
        %235 = vmatprep.subr.bf16.mxu0 0
        %236 = vmatpush1.bf16.msra.mxu0 0
        %237 = vmatprep.subr.bf16.mxu0 0
        %238 = vmatpush1.bf16.msra.mxu0 0
        %239 = vmatprep.subr.bf16.mxu0 0
        %240 = vmatpush1.bf16.msra.mxu0 0
        %241 = vmatprep.subr.bf16.mxu0 0
        %242 = vmatpush1.bf16.msra.mxu0 0
        %243 = vmatprep.subr.bf16.mxu0 0
        %244 = vmatpush1.bf16.msra.mxu0 %v224
        %245 = vmatprep.subr.bf16.mxu0 0
        %246 = vmatpush1.bf16.msra.mxu0 %v223
        %247 = vmatprep.subr.bf16.mxu0 0
        %248 = vmatpush2.bf16.msra.mxu0 0
        %249 = vmatprep.subr.bf16.mxu0 0
        %250 = vmatpush2.bf16.msra.mxu0 0
        %251 = vmatprep.subr.bf16.mxu0 0
        %252 = vmatpush2.bf16.msra.mxu0 0
        %253 = vmatprep.subr.bf16.mxu0 0
        %254 = vmatpush2.bf16.msra.mxu0 0
        %255 = vmatprep.subr.bf16.mxu0 0
        %256 = vmatpush2.bf16.msra.mxu0 0
        %257 = vmatprep.subr.bf16.mxu0 0
        %258 = vmatpush2.bf16.msra.mxu0 0
        %259 = vmatprep.subr.bf16.mxu0 0
        %260 = vmatpush2.bf16.msra.mxu0 0
        %261 = vmatprep.subr.bf16.mxu0 0
        %262 = vmatpush2.bf16.msra.mxu0 0
        %263 = vmatprep.mubr.bf16.mxu0 0
        %264 = vmatmul.mubr.bf16.gmra.mxu0 %v229
        %v265 = vpop.f32.mrf.mxu0
        %v266 = vadd.f32 %v213, %v265
        %v267 = vpop.f32.mrf.mxu0
        %v268 = vpop.f32.mrf.mxu0
        %v269 = vpop.f32.mrf.mxu0
        %270 = vdwg.mxu0
        %271 = vst.msk [vmem:[%s200] sm:$0xff] %vm227, %v266
        %s272 = sand.u32 %s97, 1
        %s273 = scalar_lea.sflag [#allocation4], %s272
        %s274 = sand.u32 %s97, 1
        %s275 = smul.addr %s274, 8
        %s276 = scalar_lea.vmem [#allocation7], %s275
        // Predicated region
        $region41: #{tpu_custom_call.1} parent=31 // pred_check
          %p277 = pneg %p107
        $region42: #{tpu_custom_call.1} parent=31 // pred_check_branch
          %279 = sbr.rel (%p277) target = $region44
        $region43: #{tpu_custom_call.1} parent=31 // pred_region
          %s281 = ssub.s32 128, 128
          %282 = vsyncadd %s273, %s281
          %s283 = smul.addr %s21, 128
          %s284 = scalar_lea.hbm %s3, %s283
          %s286 = sshll.u32 %s276, 4
          %s287 = int_to_ptr.vmem [resolvable:$true] %s286
          %289 = dma.vmem_to_hbm [thread:$0]  %s287, 128, %s284, %s273
        $region44: #{tpu_custom_call.1} parent=31 // pred_fallthru
          _
      $region32: #{tpu_custom_call.1} parent=5 // pred_fallthru
        _
      %p290 = scmp.le.s32.totalorder 2, %s16
      // Predicated region
      $region45: #{tpu_custom_call.1} parent=5 // pred_check
        %p291 = pneg %p290
      $region46: #{tpu_custom_call.1} parent=5 // pred_check_branch
        %293 = sbr.rel (%p291) target = $region48
      $region47: #{tpu_custom_call.1} parent=5 // pred_region
        %s294 = ssub.s32 %s16, 2
        // Predicated region
        $region49: #{tpu_custom_call.1} parent=47 // pred_check
          %p295 = pneg %p113
        $region50: #{tpu_custom_call.1} parent=47 // pred_check_branch
          %297 = sbr.rel (%p295) target = $region52
        $region51: #{tpu_custom_call.1} parent=47 // pred_region
          %s298 = sand.u32 %s98, 1
          %s299 = scalar_lea.sflag [#allocation4], %s298
          %s300 = sand.u32 %s98, 1
          %s301 = smul.addr %s300, 8
          %s302 = scalar_lea.vmem [#allocation7], %s301
          %303 = dma.done %s299, 128
        $region52: #{tpu_custom_call.1} parent=47 // pred_fallthru
          _
      $region48: #{tpu_custom_call.1} parent=5 // pred_fallthru
        _
    $region6: #{tpu_custom_call.1} parent=1 // loop_footer
      %s20 = sadd.s32 1, %s16
    $region7: #{tpu_custom_call.1} parent=1 // loop_footer_branch
      %15 = sbr.rel target = $region3
    $region8: #{tpu_custom_call.1} parent=1 // loop_exit
      _
    %304 = vsyncpa [#allocation3], 1
    %s305 = scalar_lea.sflag [#allocation3], 1
    %306 = vsyncpa %s305, 1
    %307 = vsyncpa [#allocation6], 1
    %308 = vsyncpa [#allocation4], 1
    %s309 = scalar_lea.sflag [#allocation4], 1
    %310 = vsyncpa %s309, 1

</llo_original>
